<compile_context>
chip_gen: v6e
topology: v6e:2x2x1
jax: 0.10.0
libtpu: 0.0.40
codegen_flags: <defaults>
</compile_context>

<pallas_src>
import functools

import numpy as np
import jax
import jax.numpy as jnp
from jax.experimental import pallas as pl
from jax.experimental.pallas import tpu as pltpu

VMEM = pltpu.MemorySpace.VMEM
SMEM = pltpu.MemorySpace.SMEM

_LANE = 128
_SUBLANE = 8
_PAD_LOGIT = -1e4        # bf16-representable; exp(-1e4) underflows to 0 in f32 -> pads add exactly 0
_TILE_N_MAX = 256        # 256 x 2048 bf16 = 1 MiB per input tile; x2 inputs x2 buffers = 4 MiB,
_TILE_P_MAX = 2048       #   comfortably inside v7x's 64 MiB VMEM (and v5e/v6e scoped limits)


def _round_up(n, m):
    return ((n + m - 1) // m) * m


def _balanced_tile(size, align, max_tile):
    """Pick tile <= max_tile (multiple of `align`) minimizing padding; return (tile, padded)."""
    size_a = _round_up(max(size, 1), align)
    n_tiles = -(-size_a // max_tile)
    tile = _round_up(-(-size_a // n_tiles), align)
    return tile, tile * n_tiles


# ----------------------------------------------------------------------------
# Fused, tiled Pallas kernel: loss_ce, loss_mask, loss_dice, loss_contrastive
# ----------------------------------------------------------------------------
def _fused_criterion_kernel(logits_ref, tgt_ref, scale_ref,
                            px_ref, pt_ref,
                            img_ref, txt_ref,
                            out_ref,
                            bce_acc, pt_acc, p_acc, t_acc,
                            *, num_classes, eos_coef, inv_num_points, inv_num_masks):
    f32 = jnp.float32
    i = pl.program_id(0)                 # mask-tile axis ("parallel")
    j = pl.program_id(1)                 # point-tile axis ("arbitrary", innermost)
    last_j = pl.num_programs(1) - 1

    # ---------------- per-mask running sums, reset at the first point tile ----------------
    @pl.when(j == 0)
    def _init():
        bce_acc[...] = jnp.zeros_like(bce_acc)
        pt_acc[...] = jnp.zeros_like(pt_acc)
        p_acc[...] = jnp.zeros_like(p_acc)
        t_acc[...] = jnp.zeros_like(t_acc)

    # ---------------- masks: sigmoid BCE + dice sums over this (tile_n, tile_p) tile ------
    # bf16 operands in HBM (halved DMA traffic), f32 math in-register.
    x = px_ref[...].astype(f32)
    t = pt_ref[...].astype(f32)
    e = jnp.exp(-jnp.abs(x))                       # single EUP exp pass, shared below
    one_plus_e = 1.0 + e
    bce = jnp.maximum(x, 0.0) - x * t + jnp.log(one_plus_e)
    r = pl.reciprocal(one_plus_e, approx=True)     # EUP, not a VPU divide (~1e-3 rel err, fine for a loss)
    p = jnp.where(x >= 0.0, r, e * r)              # sigmoid(x) from the shared exp

    bce_acc[...] += jnp.sum(bce, axis=1, keepdims=True)
    pt_acc[...] += jnp.sum(p * t, axis=1, keepdims=True)
    p_acc[...] += jnp.sum(p, axis=1, keepdims=True)
    t_acc[...] += jnp.sum(t, axis=1, keepdims=True)

    # ---------------- finalize this mask tile's partial losses at the last point tile -----
    @pl.when(j == last_j)
    def _finalize_masks():
        # mean over points per mask, sum over masks, / num_masks == sum * (1/P) * (1/nm)
        mask_part = jnp.sum(bce_acc[...]) * (inv_num_points * inv_num_masks)
        dice_per = 1.0 - (2.0 * pt_acc[...] + 1.0) / (p_acc[...] + t_acc[...] + 1.0)
        dice_part = jnp.sum(dice_per) * inv_num_masks

        row = jax.lax.broadcasted_iota(jnp.int32, (8, 128), 0)
        lane = jax.lax.broadcasted_iota(jnp.int32, (8, 128), 1)
        first_row = row == 0
        blk = jnp.where(first_row & (lane == 0), mask_part, 0.0)
        blk = blk + jnp.where(first_row & (lane == 1), dice_part, 0.0)
        out_ref[...] = blk.astype(f32)

    # ---------------- labels CE + contrastive: tiny, computed once (first mask tile) ------
    @pl.when((i == 0) & (j == last_j))
    def _labels_and_contrastive():
        # labels: weighted cross-entropy on UNPADDED [R, C1] logits
        logits = logits_ref[...].astype(f32)                      # [R, C1]
        tgt = tgt_ref[...]                                        # [R, 1] int32
        R, C1 = logits.shape
        m = jnp.max(logits, axis=-1, keepdims=True)
        lse = jnp.log(jnp.sum(jnp.exp(logits - m), axis=-1, keepdims=True)) + m
        cls = jax.lax.broadcasted_iota(jnp.int32, (R, C1), 1)
        onehot = (cls == tgt).astype(f32)
        logit_y = jnp.sum(logits * onehot, axis=-1, keepdims=True)
        # torch: sum_{b,q} empty_weight[y]*NLL / sum(ce_weight); ce_weight == empty_weight[y]
        w_y = jnp.where(tgt == num_classes, eos_coef, 1.0).astype(f32)
        ce = jnp.sum(w_y * (lse - logit_y)) / jnp.sum(w_y)

        # contrastive: symmetric InfoNCE, single BxB logits matrix
        # TODO(synk): for large global-batch B on v5e, cast img_n/txt_n to bf16 before the dot.
        img = img_ref[...].astype(f32)
        txt = txt_ref[...].astype(f32)
        img_n = img * jax.lax.rsqrt(jnp.sum(img * img, axis=-1, keepdims=True) + 1e-24)
        txt_n = txt * jax.lax.rsqrt(jnp.sum(txt * txt, axis=-1, keepdims=True) + 1e-24)
        scale = scale_ref[0, 0]                                   # clamped in the wrapper (SMEM scalar)
        lp = jax.lax.dot_general(img_n, txt_n, (((1,), (1,)), ((), ())),
                                 preferred_element_type=f32) * scale      # [B, B]
        Bn = lp.shape[0]
        diag_sum = scale * jnp.sum(img_n * txt_n)                 # sum_i lp[i, i] via row dots
        m_r = jnp.max(lp, axis=1, keepdims=True)
        lse_r = jnp.log(jnp.sum(jnp.exp(lp - m_r), axis=1, keepdims=True)) + m_r   # image-side
        m_c = jnp.max(lp, axis=0, keepdims=True)
        lse_c = jnp.log(jnp.sum(jnp.exp(lp - m_c), axis=0, keepdims=True)) + m_c   # text-side (lp.T rows)
        contr = (jnp.sum(lse_r) + jnp.sum(lse_c) - 2.0 * diag_sum) * (1.0 / Bn)

        row = jax.lax.broadcasted_iota(jnp.int32, (8, 128), 0)
        lane = jax.lax.broadcasted_iota(jnp.int32, (8, 128), 1)
        first_row = row == 0
        add = jnp.where(first_row & (lane == 2), ce, 0.0)
        add = add + jnp.where(first_row & (lane == 3), contr, 0.0)
        out_ref[...] = out_ref[...] + add.astype(f32)


def fused_criterion_call(logits2d, tgt2d, scale11, point_logits, point_labels,
                         image_x, text_x, *, num_points, num_masks,
                         num_classes, eos_coef, tile_n, tile_p):
    n_pad, p_pad = point_logits.shape
    nN, nP = n_pad // tile_n, p_pad // tile_p
    R, C1 = logits2d.shape
    B, D = image_x.shape

    kernel = functools.partial(
        _fused_criterion_kernel,
        num_classes=num_classes,
        eos_coef=float(eos_coef),
        inv_num_points=1.0 / float(num_points),
        inv_num_masks=1.0 / float(num_masks))

    grid_spec = pltpu.PrefetchScalarGridSpec(
        num_scalar_prefetch=0,
        grid=(nN, nP),
        in_specs=[
            pl.BlockSpec((R, C1), lambda i, j: (0, 0)),            # class logits (resident, unpadded)
            pl.BlockSpec((R, 1), lambda i, j: (0, 0)),             # target classes (resident)
            pl.BlockSpec(memory_space=SMEM),                       # clamped logit scale (1,1) scalar
            pl.BlockSpec((tile_n, tile_p), lambda i, j: (i, j)),   # point logits (bf16, pipelined)
            pl.BlockSpec((tile_n, tile_p), lambda i, j: (i, j)),   # point labels (bf16, pipelined)
            pl.BlockSpec((B, D), lambda i, j: (0, 0)),             # image features (resident)
            pl.BlockSpec((B, D), lambda i, j: (0, 0)),             # text features (resident)
        ],
        out_specs=pl.BlockSpec((8, 128), lambda i, j: (i, 0)),     # per-mask-tile partial sums
        scratch_shapes=[pltpu.VMEM((tile_n, 1), jnp.float32)] * 4,
    )

    partials = pl.pallas_call(
        kernel,
        out_shape=jax.ShapeDtypeStruct((nN * 8, 128), jnp.float32),
        grid_spec=grid_spec,
        compiler_params=pltpu.CompilerParams(
            dimension_semantics=("parallel", "arbitrary"),         # mask axis across TCs on v7x
            vmem_limit_bytes=48 * 1024 * 1024),
    )(logits2d, tgt2d, scale11, point_logits, point_labels, image_x, text_x)

    # rows 1..7 of each tile block and lanes >3 are zero; i>0 tiles carry zeros in lanes 2/3
    loss_mask = jnp.sum(partials[:, 0])
    loss_dice = jnp.sum(partials[:, 1])
    loss_ce = jnp.sum(partials[:, 2])
    loss_contrastive = jnp.sum(partials[:, 3])
    return loss_ce, loss_mask, loss_dice, loss_contrastive


# ----------------------------------------------------------------------------
# JAX glue: point sampling (grid_sample, align_corners=False, zero padding)
# ----------------------------------------------------------------------------
def _bilinear_point_sample(inp, coords):
    """inp: [N, C, H, W]; coords: [N, P, 2] in [0,1], (x, y) order. Returns [N, C, P]."""
    N, C, H, W = inp.shape
    x = 2.0 * coords[..., 0] - 1.0
    y = 2.0 * coords[..., 1] - 1.0
    ix = ((x + 1.0) * W - 1.0) / 2.0
    iy = ((y + 1.0) * H - 1.0) / 2.0
    x0 = jnp.floor(ix)
    x1 = x0 + 1.0
    y0 = jnp.floor(iy)
    y1 = y0 + 1.0
    wx1 = ix - x0
    wx0 = 1.0 - wx1
    wy1 = iy - y0
    wy0 = 1.0 - wy1

    def corner(yy, xx):
        valid = ((xx >= 0) & (xx <= W - 1) & (yy >= 0) & (yy <= H - 1)).astype(inp.dtype)
        xi = jnp.clip(xx, 0, W - 1).astype(jnp.int32)
        yi = jnp.clip(yy, 0, H - 1).astype(jnp.int32)
        vals = jax.vmap(lambda m, yr, xr: m[:, yr, xr])(inp, yi, xi)   # [N, C, P]
        return vals * valid[:, None, :]

    return (corner(y0, x0) * (wy0 * wx0)[:, None, :]
            + corner(y0, x1) * (wy0 * wx1)[:, None, :]
            + corner(y1, x0) * (wy1 * wx0)[:, None, :]
            + corner(y1, x1) * (wy1 * wx1)[:, None, :])


def get_uncertain_point_coords_with_randomness(mask_logits, key, num_points,
                                               oversample_ratio, importance_sample_ratio):
    N = mask_logits.shape[0]
    num_sampled = int(num_points * oversample_ratio)
    k1, k2 = jax.random.split(key)
    point_coords = jax.random.uniform(k1, (N, num_sampled, 2), dtype=jnp.float32)
    point_logits = _bilinear_point_sample(mask_logits, point_coords)          # [N,1,num_sampled]
    uncertainties = -jnp.abs(point_logits[:, 0, :])                           # calculate_uncertainty
    num_uncertain = int(importance_sample_ratio * num_points)
    num_random = num_points - num_uncertain
    _, idx = jax.lax.top_k(uncertainties, num_uncertain)                      # [N, num_uncertain]
    idx3 = jnp.broadcast_to(idx[..., None], idx.shape + (2,))
    coords = jnp.take_along_axis(point_coords, idx3, axis=1)                  # [N, num_uncertain, 2]
    if num_random > 0:
        rnd = jax.random.uniform(k2, (N, num_random, 2), dtype=jnp.float32)
        coords = jnp.concatenate([coords, rnd], axis=1)
    return coords


# ----------------------------------------------------------------------------
# SetCriterion (Pallas-backed, single fused & tiled loss kernel)
# ----------------------------------------------------------------------------
class SetCriterionPallas:
    def __init__(self, num_classes, eos_coef, losses, num_points,
                 oversample_ratio, importance_sample_ratio,
                 contrast_temperature=None):
        self.num_classes = num_classes
        self.eos_coef = eos_coef
        self.losses = losses
        self.num_points = num_points
        self.oversample_ratio = oversample_ratio
        self.importance_sample_ratio = importance_sample_ratio

        if contrast_temperature is not None:
            # deterministic parameter init (same as nn.Parameter(ones * log(1/T)))
            self.contrast_logit_scale = jnp.asarray(
                [[np.log(1.0 / contrast_temperature)]], dtype=np.float32)
        else:
            self.contrast_logit_scale = jnp.zeros((1, 1), jnp.float32)

    def _matcher(self, outputs, targets):
        # TODO(synk): Hungarian matching (scipy.linear_sum_assignment) has no clean Pallas
        # equivalent; deterministic identity matching is used for this synthetic kernel.
        return [(np.arange(len(t["labels"])), np.arange(len(t["labels"]))) for t in targets]

    # ------------------ operand preparation (JAX / numpy glue) ---------------
    def _prepare_labels(self, outputs, indices, batch_idx, src_idx, targets):
        src_logits = outputs["pred_logits"].astype(jnp.float32)
        B, Q, C1 = src_logits.shape
        assert C1 == self.num_classes + 1
        matched = jnp.concatenate(
            [jnp.asarray(targets[b]["labels"])[np.asarray(tgt)]
             for b, (_, tgt) in enumerate(indices)]).astype(jnp.int32)
        flat_pos = jnp.asarray(batch_idx * Q + src_idx, jnp.int32)
        tc = jnp.full((B * Q,), self.num_classes, jnp.int32).at[flat_pos].set(matched)
        # no class-axis lane padding: full-array blocks are legal and the CE result is a scalar
        return src_logits.reshape(B * Q, C1), tc.reshape(B * Q, 1)

    def _prepare_masks(self, outputs, indices, batch_idx, src_idx, targets, key):
        pred_masks = outputs["pred_masks"].astype(jnp.float32)                 # [B,Q,H,W]
        src_sel = pred_masks[jnp.asarray(batch_idx), jnp.asarray(src_idx)]     # [N,H,W]
        # TODO(synk): nested_tensor_from_tensor_list padding of ragged GT resolutions is not
        # reproduced; all target masks are assumed to share one resolution here.
        tgt_sel = jnp.concatenate(
            [jnp.asarray(targets[b]["masks"])[np.asarray(tgt)]
             for b, (_, tgt) in enumerate(indices)], axis=0).astype(jnp.float32)

        src_masks = src_sel[:, None]                                           # [N,1,H,W]
        tgt_masks = tgt_sel[:, None]                                           # [N,1,Hg,Wg]
        coords = get_uncertain_point_coords_with_randomness(
            src_masks, key, self.num_points, self.oversample_ratio,
            self.importance_sample_ratio)
        point_labels = _bilinear_point_sample(tgt_masks, coords)[:, 0, :]      # [N, P]
        point_logits = _bilinear_point_sample(src_masks, coords)[:, 0, :]      # [N, P]

        n, p = point_logits.shape
        tile_n, n_pad = _balanced_tile(n, _SUBLANE, _TILE_N_MAX)
        tile_p, p_pad = _balanced_tile(p, _LANE, _TILE_P_MAX)
        # bf16 operands halve the (dominant) point-tensor HBM traffic; pad logits with a
        # bf16-representable -1e4 and labels with 0 -> zero contribution to every sum.
        point_logits = jnp.pad(point_logits.astype(jnp.bfloat16),
                               ((0, n_pad - n), (0, p_pad - p)),
                               constant_values=_PAD_LOGIT)
        point_labels = jnp.pad(point_labels.astype(jnp.bfloat16),
                               ((0, n_pad - n), (0, p_pad - p)))
        return point_logits, point_labels, tile_n, tile_p

    def _prepare_contrastive(self, outputs):
        img = outputs["contrastive_logits"].astype(jnp.float32)
        txt = outputs["texts"].astype(jnp.float32)
        return img.reshape(img.shape[0], -1), txt.reshape(txt.shape[0], -1)

    def forward(self, outputs, targets, key):
        indices = self._matcher(outputs, targets)
        num_masks = max(float(sum(len(t["labels"]) for t in targets)), 1.0)
        # single device: no all_reduce / world_size division

        batch_idx = np.concatenate(
            [np.full(len(src), b, dtype=np.int32) for b, (src, _) in enumerate(indices)])
        src_idx = np.concatenate([np.asarray(src) for src, _ in indices]).astype(np.int32)

        logits2d, tc2d = self._prepare_labels(outputs, indices, batch_idx, src_idx, targets)
        point_logits, point_labels, tile_n, tile_p = self._prepare_masks(
            outputs, indices, batch_idx, src_idx, targets, key)
        image_x, text_x = self._prepare_contrastive(outputs)
        # hoisted out of the kernel: clamp(exp(logit_scale), max=100) -> single SMEM scalar
        scale11 = jnp.minimum(jnp.exp(self.contrast_logit_scale), 100.0).astype(jnp.float32)

        loss_ce, loss_mask, loss_dice, loss_contrastive = fused_criterion_call(
            logits2d, tc2d, scale11, point_logits, point_labels, image_x, text_x,
            num_points=self.num_points, num_masks=num_masks,
            num_classes=self.num_classes, eos_coef=self.eos_coef,
            tile_n=tile_n, tile_p=tile_p)

        all_losses = {
            "labels": {"loss_ce": loss_ce},
            "masks": {"loss_mask": loss_mask, "loss_dice": loss_dice},
            "contrastive": {"loss_contrastive": loss_contrastive},
        }
        losses = {}
        for loss in self.losses:
            losses.update(all_losses[loss])
        # TODO(synk): 'condition' (same math as contrastive), 'modality' (dict-of-dicts CE)
        # and the aux_outputs loop are omitted in this synthetic single-pass script.
        return losses


# ----------------------------------------------------------------------------
# main
# ----------------------------------------------------------------------------
if __name__ == "__main__":
    key = jax.random.PRNGKey(0)
    (k_logits, k_masks, k_img, k_txt, k_tmask0, k_tmask1,
     k_lbl0, k_lbl1, k_sample) = jax.random.split(key, 9)

    B, Q, C = 2, 8, 4          # batch, queries, num_classes (no-object class index = C)
    H = W = 16                 # predicted mask resolution
    Hg = Wg = 32               # ground-truth mask resolution
    D = 32                     # contrastive feature dim

    outputs = {
        "pred_logits": jax.random.normal(k_logits, (B, Q, C + 1), dtype=jnp.float32),
        "pred_masks": jax.random.normal(k_masks, (B, Q, H, W), dtype=jnp.float32),
        "contrastive_logits": jax.random.normal(k_img, (B, D), dtype=jnp.float32),
        "texts": jax.random.normal(k_txt, (B, D), dtype=jnp.float32),
    }
    targets = [
        {"labels": jax.random.randint(k_lbl0, (3,), 0, C),
         "masks": (jax.random.uniform(k_tmask0, (3, Hg, Wg)) > 0.5).astype(jnp.float32)},
        {"labels": jax.random.randint(k_lbl1, (2,), 0, C),
         "masks": (jax.random.uniform(k_tmask1, (2, Hg, Wg)) > 0.5).astype(jnp.float32)},
    ]

    criterion = SetCriterionPallas(
        num_classes=C,
        eos_coef=0.1,
        losses=["labels", "masks", "contrastive"],
        num_points=16,
        oversample_ratio=3.0,
        importance_sample_ratio=0.75,
        contrast_temperature=0.07,
    )

    losses = criterion.forward(outputs, targets, k_sample)
    for v in losses.values():
        jax.block_until_ready(v)
    assert all(bool(jnp.isfinite(v)) for v in losses.values())
    print("KERNEL_OK")
</pallas_src>

<mosaic_0001>
module attributes {stable_mosaic.version = 11 : i64} {
  func.func @_fused_criterion_kernel(%arg0: i32, %arg1: i32, %arg2: memref<16x5xf32, #tpu.memory_space<vmem>>, %arg3: memref<16x1xi32, #tpu.memory_space<vmem>>, %arg4: memref<1x1xf32, #tpu.memory_space<smem>>, %arg5: memref<8x128xbf16, #tpu.memory_space<vmem>>, %arg6: memref<8x128xbf16, #tpu.memory_space<vmem>>, %arg7: memref<2x32xf32, #tpu.memory_space<vmem>>, %arg8: memref<2x32xf32, #tpu.memory_space<vmem>>, %arg9: memref<8x128xf32, #tpu.memory_space<vmem>>, %arg10: memref<8x1xf32, #tpu.memory_space<vmem>>, %arg11: memref<8x1xf32, #tpu.memory_space<vmem>>, %arg12: memref<8x1xf32, #tpu.memory_space<vmem>>, %arg13: memref<8x1xf32, #tpu.memory_space<vmem>>) attributes {dimension_semantics = [#tpu.dimension_semantics<parallel>, #tpu.dimension_semantics<arbitrary>], iteration_bounds = array<i64: 1, 1>, scalar_prefetch = 0 : i64, scratch_operands = 4 : i64, tpu.core_type = #tpu.core_type<tc>, window_params = [{pipeline_mode = #tpu.pipeline_mode<synchronous>, transform_indices = @transform_0, window_bounds = array<i64: 16, 5>}, {pipeline_mode = #tpu.pipeline_mode<synchronous>, transform_indices = @transform_1, window_bounds = array<i64: 16, 1>}, {transform_indices = @transform_2, window_bounds = array<i64: 1, 1>}, {transform_indices = @transform_3, window_bounds = array<i64: 8, 128>}, {transform_indices = @transform_4, window_bounds = array<i64: 8, 128>}, {pipeline_mode = #tpu.pipeline_mode<synchronous>, transform_indices = @transform_5, window_bounds = array<i64: 2, 32>}, {pipeline_mode = #tpu.pipeline_mode<synchronous>, transform_indices = @transform_6, window_bounds = array<i64: 2, 32>}, {transform_indices = @transform_7, window_bounds = array<i64: 8, 128>}]} {
    %c0_i32 = arith.constant 0 : i32
    %0 = arith.cmpi eq, %arg1, %c0_i32 : i32
    %1 = arith.extui %0 : i1 to i32
    %c0_i32_0 = arith.constant 0 : i32
    %2 = arith.cmpi ne, %1, %c0_i32_0 : i32
    scf.if %2 {
      %cst_32 = arith.constant 0.000000e+00 : f32
      %53 = vector.broadcast %cst_32 : f32 to vector<8x1xf32>
      %c0_33 = arith.constant 0 : index
      %c0_34 = arith.constant 0 : index
      %54 = vector.load %arg10[%c0_33, %c0_34] : memref<8x1xf32, #tpu.memory_space<vmem>>, vector<8x1xf32>
      tpu.vector_store %arg10[%c0_33, %c0_34], %53 {strides = array<i32>} : memref<8x1xf32, #tpu.memory_space<vmem>>, vector<8x1xf32>,
      %cst_35 = arith.constant 0.000000e+00 : f32
      %55 = vector.broadcast %cst_35 : f32 to vector<8x1xf32>
      %c0_36 = arith.constant 0 : index
      %c0_37 = arith.constant 0 : index
      %56 = vector.load %arg11[%c0_36, %c0_37] : memref<8x1xf32, #tpu.memory_space<vmem>>, vector<8x1xf32>
      tpu.vector_store %arg11[%c0_36, %c0_37], %55 {strides = array<i32>} : memref<8x1xf32, #tpu.memory_space<vmem>>, vector<8x1xf32>,
      %cst_38 = arith.constant 0.000000e+00 : f32
      %57 = vector.broadcast %cst_38 : f32 to vector<8x1xf32>
      %c0_39 = arith.constant 0 : index
      %c0_40 = arith.constant 0 : index
      %58 = vector.load %arg12[%c0_39, %c0_40] : memref<8x1xf32, #tpu.memory_space<vmem>>, vector<8x1xf32>
      tpu.vector_store %arg12[%c0_39, %c0_40], %57 {strides = array<i32>} : memref<8x1xf32, #tpu.memory_space<vmem>>, vector<8x1xf32>,
      %cst_41 = arith.constant 0.000000e+00 : f32
      %59 = vector.broadcast %cst_41 : f32 to vector<8x1xf32>
      %c0_42 = arith.constant 0 : index
      %c0_43 = arith.constant 0 : index
      %60 = vector.load %arg13[%c0_42, %c0_43] : memref<8x1xf32, #tpu.memory_space<vmem>>, vector<8x1xf32>
      tpu.vector_store %arg13[%c0_42, %c0_43], %59 {strides = array<i32>} : memref<8x1xf32, #tpu.memory_space<vmem>>, vector<8x1xf32>,
    } else {
    }
    %c0 = arith.constant 0 : index
    %c0_1 = arith.constant 0 : index
    %3 = vector.load %arg5[%c0, %c0_1] : memref<8x128xbf16, #tpu.memory_space<vmem>>, vector<8x128xbf16>
    %4 = arith.extf %3 : vector<8x128xbf16> to vector<8x128xf32>
    %c0_2 = arith.constant 0 : index
    %c0_3 = arith.constant 0 : index
    %5 = vector.load %arg6[%c0_2, %c0_3] : memref<8x128xbf16, #tpu.memory_space<vmem>>, vector<8x128xbf16>
    %6 = arith.extf %5 : vector<8x128xbf16> to vector<8x128xf32>
    %7 = math.absf %4 : vector<8x128xf32>
    %cst = arith.constant 0.000000e+00 : f32
    %8 = vector.broadcast %cst : f32 to vector<8x128xf32>
    %9 = arith.subf %8, %7 : vector<8x128xf32>
    %10 = math.exp %9 : vector<8x128xf32>
    %cst_4 = arith.constant 1.000000e+00 : f32
    %11 = vector.broadcast %cst_4 : f32 to vector<8x128xf32>
    %12 = arith.addf %11, %10 : vector<8x128xf32>
    %cst_5 = arith.constant 0.000000e+00 : f32
    %13 = vector.broadcast %cst_5 : f32 to vector<8x128xf32>
    %14 = arith.maximumf %4, %13 : vector<8x128xf32>
    %15 = arith.mulf %4, %6 : vector<8x128xf32>
    %16 = arith.subf %14, %15 : vector<8x128xf32>
    %17 = math.log %12 : vector<8x128xf32>
    %18 = arith.addf %16, %17 : vector<8x128xf32>
    %19 = tpu.reciprocal %12 {approx = true} : vector<8x128xf32> -> vector<8x128xf32>
    %cst_6 = arith.constant 0.000000e+00 : f32
    %20 = vector.broadcast %cst_6 : f32 to vector<8x128xf32>
    %21 = arith.cmpf oge, %4, %20 : vector<8x128xf32>
    %22 = arith.mulf %10, %19 : vector<8x128xf32>
    %23 = arith.select %21, %19, %22 : vector<8x128xi1>, vector<8x128xf32>
    %c0_7 = arith.constant 0 : index
    %c0_8 = arith.constant 0 : index
    %24 = vector.load %arg10[%c0_7, %c0_8] : memref<8x1xf32, #tpu.memory_space<vmem>>, vector<8x1xf32>
    %cst_9 = arith.constant dense<0.000000e+00> : vector<8xf32>
    %25 = vector.multi_reduction <add>, %18, %cst_9 [1] : vector<8x128xf32> to vector<8xf32>
    %26 = vector.shape_cast %25 : vector<8xf32> to vector<8x1xf32>
    %27 = arith.addf %24, %26 : vector<8x1xf32>
    %c0_10 = arith.constant 0 : index
    %c0_11 = arith.constant 0 : index
    %28 = vector.load %arg10[%c0_10, %c0_11] : memref<8x1xf32, #tpu.memory_space<vmem>>, vector<8x1xf32>
    tpu.vector_store %arg10[%c0_10, %c0_11], %27 {strides = array<i32>} : memref<8x1xf32, #tpu.memory_space<vmem>>, vector<8x1xf32>,
    %c0_12 = arith.constant 0 : index
    %c0_13 = arith.constant 0 : index
    %29 = vector.load %arg11[%c0_12, %c0_13] : memref<8x1xf32, #tpu.memory_space<vmem>>, vector<8x1xf32>
    %30 = arith.mulf %23, %6 : vector<8x128xf32>
    %cst_14 = arith.constant dense<0.000000e+00> : vector<8xf32>
    %31 = vector.multi_reduction <add>, %30, %cst_14 [1] : vector<8x128xf32> to vector<8xf32>
    %32 = vector.shape_cast %31 : vector<8xf32> to vector<8x1xf32>
    %33 = arith.addf %29, %32 : vector<8x1xf32>
    %c0_15 = arith.constant 0 : index
    %c0_16 = arith.constant 0 : index
    %34 = vector.load %arg11[%c0_15, %c0_16] : memref<8x1xf32, #tpu.memory_space<vmem>>, vector<8x1xf32>
    tpu.vector_store %arg11[%c0_15, %c0_16], %33 {strides = array<i32>} : memref<8x1xf32, #tpu.memory_space<vmem>>, vector<8x1xf32>,
    %c0_17 = arith.constant 0 : index
    %c0_18 = arith.constant 0 : index
    %35 = vector.load %arg12[%c0_17, %c0_18] : memref<8x1xf32, #tpu.memory_space<vmem>>, vector<8x1xf32>
    %cst_19 = arith.constant dense<0.000000e+00> : vector<8xf32>
    %36 = vector.multi_reduction <add>, %23, %cst_19 [1] : vector<8x128xf32> to vector<8xf32>
    %37 = vector.shape_cast %36 : vector<8xf32> to vector<8x1xf32>
    %38 = arith.addf %35, %37 : vector<8x1xf32>
    %c0_20 = arith.constant 0 : index
    %c0_21 = arith.constant 0 : index
    %39 = vector.load %arg12[%c0_20, %c0_21] : memref<8x1xf32, #tpu.memory_space<vmem>>, vector<8x1xf32>
    tpu.vector_store %arg12[%c0_20, %c0_21], %38 {strides = array<i32>} : memref<8x1xf32, #tpu.memory_space<vmem>>, vector<8x1xf32>,
    %c0_22 = arith.constant 0 : index
    %c0_23 = arith.constant 0 : index
    %40 = vector.load %arg13[%c0_22, %c0_23] : memref<8x1xf32, #tpu.memory_space<vmem>>, vector<8x1xf32>
    %cst_24 = arith.constant dense<0.000000e+00> : vector<8xf32>
    %41 = vector.multi_reduction <add>, %6, %cst_24 [1] : vector<8x128xf32> to vector<8xf32>
    %42 = vector.shape_cast %41 : vector<8xf32> to vector<8x1xf32>
    %43 = arith.addf %40, %42 : vector<8x1xf32>
    %c0_25 = arith.constant 0 : index
    %c0_26 = arith.constant 0 : index
    %44 = vector.load %arg13[%c0_25, %c0_26] : memref<8x1xf32, #tpu.memory_space<vmem>>, vector<8x1xf32>
    tpu.vector_store %arg13[%c0_25, %c0_26], %43 {strides = array<i32>} : memref<8x1xf32, #tpu.memory_space<vmem>>, vector<8x1xf32>,
    %c0_i32_27 = arith.constant 0 : i32
    %45 = arith.cmpi eq, %arg1, %c0_i32_27 : i32
    %46 = arith.extui %45 : i1 to i32
    %c0_i32_28 = arith.constant 0 : i32
    %47 = arith.cmpi ne, %46, %c0_i32_28 : i32
    scf.if %47 {
      %c0_32 = arith.constant 0 : index
      %c0_33 = arith.constant 0 : index
      %53 = vector.load %arg10[%c0_32, %c0_33] : memref<8x1xf32, #tpu.memory_space<vmem>>, vector<8x1xf32>
      %54 = vector.shape_cast %53 : vector<8x1xf32> to vector<1x8x1xf32>
      %cst_34 = arith.constant dense<0.000000e+00> : vector<1xf32>
      %55 = vector.multi_reduction <add>, %54, %cst_34 [1, 2] : vector<1x8x1xf32> to vector<1xf32>
      %56 = vector.shape_cast %55 : vector<1xf32> to vector<1x1x1xf32>
      %57 = vector.extract %56[0, 0, 0] : f32 from vector<1x1x1xf32>
      %cst_35 = arith.constant 1.250000e-02 : f32
      %58 = arith.mulf %57, %cst_35 : f32
      %c0_36 = arith.constant 0 : index
      %c0_37 = arith.constant 0 : index
      %59 = vector.load %arg11[%c0_36, %c0_37] : memref<8x1xf32, #tpu.memory_space<vmem>>, vector<8x1xf32>
      %cst_38 = arith.constant 2.000000e+00 : f32
      %60 = vector.broadcast %cst_38 : f32 to vector<8x1xf32>
      %61 = arith.mulf %60, %59 : vector<8x1xf32>
      %cst_39 = arith.constant 1.000000e+00 : f32
      %62 = vector.broadcast %cst_39 : f32 to vector<8x1xf32>
      %63 = arith.addf %61, %62 : vector<8x1xf32>
      %c0_40 = arith.constant 0 : index
      %c0_41 = arith.constant 0 : index
      %64 = vector.load %arg12[%c0_40, %c0_41] : memref<8x1xf32, #tpu.memory_space<vmem>>, vector<8x1xf32>
      %c0_42 = arith.constant 0 : index
      %c0_43 = arith.constant 0 : index
      %65 = vector.load %arg13[%c0_42, %c0_43] : memref<8x1xf32, #tpu.memory_space<vmem>>, vector<8x1xf32>
      %66 = arith.addf %64, %65 : vector<8x1xf32>
      %cst_44 = arith.constant 1.000000e+00 : f32
      %67 = vector.broadcast %cst_44 : f32 to vector<8x1xf32>
      %68 = arith.addf %66, %67 : vector<8x1xf32>
      %69 = arith.divf %63, %68 : vector<8x1xf32>
      %cst_45 = arith.constant 1.000000e+00 : f32
      %70 = vector.broadcast %cst_45 : f32 to vector<8x1xf32>
      %71 = arith.subf %70, %69 : vector<8x1xf32>
      %72 = vector.shape_cast %71 : vector<8x1xf32> to vector<1x8x1xf32>
      %cst_46 = arith.constant dense<0.000000e+00> : vector<1xf32>
      %73 = vector.multi_reduction <add>, %72, %cst_46 [1, 2] : vector<1x8x1xf32> to vector<1xf32>
      %74 = vector.shape_cast %73 : vector<1xf32> to vector<1x1x1xf32>
      %75 = vector.extract %74[0, 0, 0] : f32 from vector<1x1x1xf32>
      %cst_47 = arith.constant 2.000000e-01 : f32
      %76 = arith.mulf %75, %cst_47 : f32
      %77 = tpu.iota {dimensions = array<i32: 0>} : vector<8x128xi32>
      %78 = tpu.iota {dimensions = array<i32: 1>} : vector<8x128xi32>
      %c0_i32_48 = arith.constant 0 : i32
      %79 = vector.broadcast %c0_i32_48 : i32 to vector<8x128xi32>
      %80 = arith.cmpi eq, %77, %79 : vector<8x128xi32>
      %c0_i32_49 = arith.constant 0 : i32
      %81 = vector.broadcast %c0_i32_49 : i32 to vector<8x128xi32>
      %82 = arith.cmpi eq, %78, %81 : vector<8x128xi32>
      %83 = arith.andi %80, %82 : vector<8x128xi1>
      %cst_50 = arith.constant 0.000000e+00 : f32
      %84 = vector.broadcast %58 : f32 to vector<8x128xf32>
      %85 = vector.broadcast %cst_50 : f32 to vector<8x128xf32>
      %86 = arith.select %83, %84, %85 : vector<8x128xi1>, vector<8x128xf32>
      %c1_i32 = arith.constant 1 : i32
      %87 = vector.broadcast %c1_i32 : i32 to vector<8x128xi32>
      %88 = arith.cmpi eq, %78, %87 : vector<8x128xi32>
      %89 = arith.andi %80, %88 : vector<8x128xi1>
      %cst_51 = arith.constant 0.000000e+00 : f32
      %90 = vector.broadcast %76 : f32 to vector<8x128xf32>
      %91 = vector.broadcast %cst_51 : f32 to vector<8x128xf32>
      %92 = arith.select %89, %90, %91 : vector<8x128xi1>, vector<8x128xf32>
      %93 = arith.addf %86, %92 : vector<8x128xf32>
      %c0_52 = arith.constant 0 : index
      %c0_53 = arith.constant 0 : index
      %94 = vector.load %arg9[%c0_52, %c0_53] : memref<8x128xf32, #tpu.memory_space<vmem>>, vector<8x128xf32>
      tpu.vector_store %arg9[%c0_52, %c0_53], %93 {strides = array<i32>} : memref<8x128xf32, #tpu.memory_space<vmem>>, vector<8x128xf32>,
    } else {
    }
    %c0_i32_29 = arith.constant 0 : i32
    %48 = arith.cmpi eq, %arg0, %c0_i32_29 : i32
    %c0_i32_30 = arith.constant 0 : i32
    %49 = arith.cmpi eq, %arg1, %c0_i32_30 : i32
    %50 = arith.andi %48, %49 : i1
    %51 = arith.extui %50 : i1 to i32
    %c0_i32_31 = arith.constant 0 : i32
    %52 = arith.cmpi ne, %51, %c0_i32_31 : i32
    scf.if %52 {
      %c0_32 = arith.constant 0 : index
      %c0_33 = arith.constant 0 : index
      %53 = vector.load %arg2[%c0_32, %c0_33] : memref<16x5xf32, #tpu.memory_space<vmem>>, vector<16x5xf32>
      %c0_34 = arith.constant 0 : index
      %c0_35 = arith.constant 0 : index
      %54 = vector.load %arg3[%c0_34, %c0_35] : memref<16x1xi32, #tpu.memory_space<vmem>>, vector<16x1xi32>
      %cst_36 = arith.constant dense<0xFF800000> : vector<16xf32>
      %55 = vector.multi_reduction <maximumf>, %53, %cst_36 [1] : vector<16x5xf32> to vector<16xf32>
      %56 = vector.shape_cast %55 : vector<16xf32> to vector<16x1xf32>
      %57 = vector.broadcast %56 : vector<16x1xf32> to vector<16x5xf32>
      %58 = arith.subf %53, %57 : vector<16x5xf32>
      %59 = math.exp %58 : vector<16x5xf32>
      %cst_37 = arith.constant dense<0.000000e+00> : vector<16xf32>
      %60 = vector.multi_reduction <add>, %59, %cst_37 [1] : vector<16x5xf32> to vector<16xf32>
      %61 = vector.shape_cast %60 : vector<16xf32> to vector<16x1xf32>
      %62 = math.log %61 : vector<16x1xf32>
      %63 = arith.addf %62, %56 : vector<16x1xf32>
      %64 = tpu.iota {dimensions = array<i32: 1>} : vector<16x5xi32>
      %65 = vector.broadcast %54 : vector<16x1xi32> to vector<16x5xi32>
      %66 = arith.cmpi eq, %64, %65 : vector<16x5xi32>
      %67 = arith.extui %66 : vector<16x5xi1> to vector<16x5xi32>
      %68 = arith.sitofp %67 : vector<16x5xi32> to vector<16x5xf32>
      %69 = arith.mulf %53, %68 : vector<16x5xf32>
      %cst_38 = arith.constant dense<0.000000e+00> : vector<16xf32>
      %70 = vector.multi_reduction <add>, %69, %cst_38 [1] : vector<16x5xf32> to vector<16xf32>
      %71 = vector.shape_cast %70 : vector<16xf32> to vector<16x1xf32>
      %c4_i32 = arith.constant 4 : i32
      %72 = vector.broadcast %c4_i32 : i32 to vector<16x1xi32>
      %73 = arith.cmpi eq, %54, %72 : vector<16x1xi32>
      %cst_39 = arith.constant 1.000000e-01 : f32
      %cst_40 = arith.constant 1.000000e+00 : f32
      %74 = vector.broadcast %cst_39 : f32 to vector<16x1xf32>
      %75 = vector.broadcast %cst_40 : f32 to vector<16x1xf32>
      %76 = arith.select %73, %74, %75 : vector<16x1xi1>, vector<16x1xf32>
      %77 = arith.subf %63, %71 : vector<16x1xf32>
      %78 = arith.mulf %76, %77 : vector<16x1xf32>
      %79 = vector.shape_cast %78 : vector<16x1xf32> to vector<1x16x1xf32>
      %cst_41 = arith.constant dense<0.000000e+00> : vector<1xf32>
      %80 = vector.multi_reduction <add>, %79, %cst_41 [1, 2] : vector<1x16x1xf32> to vector<1xf32>
      %81 = vector.shape_cast %80 : vector<1xf32> to vector<1x1x1xf32>
      %82 = vector.extract %81[0, 0, 0] : f32 from vector<1x1x1xf32>
      %83 = vector.shape_cast %76 : vector<16x1xf32> to vector<1x16x1xf32>
      %cst_42 = arith.constant dense<0.000000e+00> : vector<1xf32>
      %84 = vector.multi_reduction <add>, %83, %cst_42 [1, 2] : vector<1x16x1xf32> to vector<1xf32>
      %85 = vector.shape_cast %84 : vector<1xf32> to vector<1x1x1xf32>
      %86 = vector.extract %85[0, 0, 0] : f32 from vector<1x1x1xf32>
      %87 = arith.divf %82, %86 : f32
      %c0_43 = arith.constant 0 : index
      %c0_44 = arith.constant 0 : index
      %88 = vector.load %arg7[%c0_43, %c0_44] : memref<2x32xf32, #tpu.memory_space<vmem>>, vector<2x32xf32>
      %c0_45 = arith.constant 0 : index
      %c0_46 = arith.constant 0 : index
      %89 = vector.load %arg8[%c0_45, %c0_46] : memref<2x32xf32, #tpu.memory_space<vmem>>, vector<2x32xf32>
      %90 = arith.mulf %88, %88 : vector<2x32xf32>
      %cst_47 = arith.constant dense<0.000000e+00> : vector<2xf32>
      %91 = vector.multi_reduction <add>, %90, %cst_47 [1] : vector<2x32xf32> to vector<2xf32>
      %92 = vector.shape_cast %91 : vector<2xf32> to vector<2x1xf32>
      %cst_48 = arith.constant 1.000000e-24 : f32
      %93 = vector.broadcast %cst_48 : f32 to vector<2x1xf32>
      %94 = arith.addf %92, %93 : vector<2x1xf32>
      %95 = math.rsqrt %94 : vector<2x1xf32>
      %96 = vector.broadcast %95 : vector<2x1xf32> to vector<2x32xf32>
      %97 = arith.mulf %88, %96 : vector<2x32xf32>
      %98 = arith.mulf %89, %89 : vector<2x32xf32>
      %cst_49 = arith.constant dense<0.000000e+00> : vector<2xf32>
      %99 = vector.multi_reduction <add>, %98, %cst_49 [1] : vector<2x32xf32> to vector<2xf32>
      %100 = vector.shape_cast %99 : vector<2xf32> to vector<2x1xf32>
      %cst_50 = arith.constant 1.000000e-24 : f32
      %101 = vector.broadcast %cst_50 : f32 to vector<2x1xf32>
      %102 = arith.addf %100, %101 : vector<2x1xf32>
      %103 = math.rsqrt %102 : vector<2x1xf32>
      %104 = vector.broadcast %103 : vector<2x1xf32> to vector<2x32xf32>
      %105 = arith.mulf %89, %104 : vector<2x32xf32>
      %c0_51 = arith.constant 0 : index
      %c0_52 = arith.constant 0 : index
      %106 = memref.load %arg4[%c0_51, %c0_52] : memref<1x1xf32, #tpu.memory_space<smem>>
      %cst_53 = arith.constant dense<0.000000e+00> : vector<2x2xf32>
      %107 = tpu.matmul %97, %105, %cst_53 {dimension_numbers = #tpu.dot_dimension_numbers<[1], [1], [0], [0], [0, 0, 1, 0], [], []>} : vector<2x32xf32>, vector<2x32xf32>, vector<2x2xf32> -> vector<2x2xf32>
      %108 = vector.broadcast %106 : f32 to vector<2x2xf32>
      %109 = arith.mulf %107, %108 : vector<2x2xf32>
      %110 = arith.mulf %97, %105 : vector<2x32xf32>
      %111 = vector.shape_cast %110 : vector<2x32xf32> to vector<1x2x32xf32>
      %cst_54 = arith.constant dense<0.000000e+00> : vector<1xf32>
      %112 = vector.multi_reduction <add>, %111, %cst_54 [1, 2] : vector<1x2x32xf32> to vector<1xf32>
      %113 = vector.shape_cast %112 : vector<1xf32> to vector<1x1x1xf32>
      %114 = vector.extract %113[0, 0, 0] : f32 from vector<1x1x1xf32>
      %115 = arith.mulf %106, %114 : f32
      %cst_55 = arith.constant dense<0xFF800000> : vector<2xf32>
      %116 = vector.multi_reduction <maximumf>, %109, %cst_55 [1] : vector<2x2xf32> to vector<2xf32>
      %117 = vector.shape_cast %116 : vector<2xf32> to vector<2x1xf32>
      %118 = vector.broadcast %117 : vector<2x1xf32> to vector<2x2xf32>
      %119 = arith.subf %109, %118 : vector<2x2xf32>
      %120 = math.exp %119 : vector<2x2xf32>
      %cst_56 = arith.constant dense<0.000000e+00> : vector<2xf32>
      %121 = vector.multi_reduction <add>, %120, %cst_56 [1] : vector<2x2xf32> to vector<2xf32>
      %122 = vector.shape_cast %121 : vector<2xf32> to vector<2x1xf32>
      %123 = math.log %122 : vector<2x1xf32>
      %124 = arith.addf %123, %117 : vector<2x1xf32>
      %cst_57 = arith.constant dense<0xFF800000> : vector<2xf32>
      %125 = vector.multi_reduction <maximumf>, %109, %cst_57 [0] : vector<2x2xf32> to vector<2xf32>
      %126 = vector.shape_cast %125 : vector<2xf32> to vector<1x2xf32>
      %127 = vector.broadcast %126 : vector<1x2xf32> to vector<2x2xf32>
      %128 = arith.subf %109, %127 : vector<2x2xf32>
      %129 = math.exp %128 : vector<2x2xf32>
      %cst_58 = arith.constant dense<0.000000e+00> : vector<2xf32>
      %130 = vector.multi_reduction <add>, %129, %cst_58 [0] : vector<2x2xf32> to vector<2xf32>
      %131 = vector.shape_cast %130 : vector<2xf32> to vector<1x2xf32>
      %132 = math.log %131 : vector<1x2xf32>
      %133 = arith.addf %132, %126 : vector<1x2xf32>
      %134 = vector.shape_cast %124 : vector<2x1xf32> to vector<1x2x1xf32>
      %cst_59 = arith.constant dense<0.000000e+00> : vector<1xf32>
      %135 = vector.multi_reduction <add>, %134, %cst_59 [1, 2] : vector<1x2x1xf32> to vector<1xf32>
      %136 = vector.shape_cast %135 : vector<1xf32> to vector<1x1x1xf32>
      %137 = vector.extract %136[0, 0, 0] : f32 from vector<1x1x1xf32>
      %138 = vector.shape_cast %133 : vector<1x2xf32> to vector<1x1x2xf32>
      %cst_60 = arith.constant dense<0.000000e+00> : vector<1xf32>
      %139 = vector.multi_reduction <add>, %138, %cst_60 [1, 2] : vector<1x1x2xf32> to vector<1xf32>
      %140 = vector.shape_cast %139 : vector<1xf32> to vector<1x1x1xf32>
      %141 = vector.extract %140[0, 0, 0] : f32 from vector<1x1x1xf32>
      %142 = arith.addf %137, %141 : f32
      %cst_61 = arith.constant 2.000000e+00 : f32
      %143 = arith.mulf %cst_61, %115 : f32
      %144 = arith.subf %142, %143 : f32
      %cst_62 = arith.constant 5.000000e-01 : f32
      %145 = arith.mulf %144, %cst_62 : f32
      %146 = tpu.iota {dimensions = array<i32: 0>} : vector<8x128xi32>
      %147 = tpu.iota {dimensions = array<i32: 1>} : vector<8x128xi32>
      %c0_i32_63 = arith.constant 0 : i32
      %148 = vector.broadcast %c0_i32_63 : i32 to vector<8x128xi32>
      %149 = arith.cmpi eq, %146, %148 : vector<8x128xi32>
      %c2_i32 = arith.constant 2 : i32
      %150 = vector.broadcast %c2_i32 : i32 to vector<8x128xi32>
      %151 = arith.cmpi eq, %147, %150 : vector<8x128xi32>
      %152 = arith.andi %149, %151 : vector<8x128xi1>
      %cst_64 = arith.constant 0.000000e+00 : f32
      %153 = vector.broadcast %87 : f32 to vector<8x128xf32>
      %154 = vector.broadcast %cst_64 : f32 to vector<8x128xf32>
      %155 = arith.select %152, %153, %154 : vector<8x128xi1>, vector<8x128xf32>
      %c3_i32 = arith.constant 3 : i32
      %156 = vector.broadcast %c3_i32 : i32 to vector<8x128xi32>
      %157 = arith.cmpi eq, %147, %156 : vector<8x128xi32>
      %158 = arith.andi %149, %157 : vector<8x128xi1>
      %cst_65 = arith.constant 0.000000e+00 : f32
      %159 = vector.broadcast %145 : f32 to vector<8x128xf32>
      %160 = vector.broadcast %cst_65 : f32 to vector<8x128xf32>
      %161 = arith.select %158, %159, %160 : vector<8x128xi1>, vector<8x128xf32>
      %162 = arith.addf %155, %161 : vector<8x128xf32>
      %c0_66 = arith.constant 0 : index
      %c0_67 = arith.constant 0 : index
      %163 = vector.load %arg9[%c0_66, %c0_67] : memref<8x128xf32, #tpu.memory_space<vmem>>, vector<8x128xf32>
      %164 = arith.addf %163, %162 : vector<8x128xf32>
      %c0_68 = arith.constant 0 : index
      %c0_69 = arith.constant 0 : index
      %165 = vector.load %arg9[%c0_68, %c0_69] : memref<8x128xf32, #tpu.memory_space<vmem>>, vector<8x128xf32>
      tpu.vector_store %arg9[%c0_68, %c0_69], %164 {strides = array<i32>} : memref<8x128xf32, #tpu.memory_space<vmem>>, vector<8x128xf32>,
    } else {
    }
    return
  }
  func.func @transform_0(%arg0: i32, %arg1: i32) -> (i32, i32) {
    %c0_i32 = arith.constant 0 : i32
    %c0_i32_0 = arith.constant 0 : i32
    %c0_i32_1 = arith.constant 0 : i32
    return %c0_i32, %c0_i32_0 : i32, i32
  }
  func.func @transform_1(%arg0: i32, %arg1: i32) -> (i32, i32) {
    %c0_i32 = arith.constant 0 : i32
    %c0_i32_0 = arith.constant 0 : i32
    %c0_i32_1 = arith.constant 0 : i32
    return %c0_i32, %c0_i32_0 : i32, i32
  }
  func.func @transform_2(%arg0: i32, %arg1: i32) -> (i32, i32) {
    %c0_i32 = arith.constant 0 : i32
    %c0_i32_0 = arith.constant 0 : i32
    %c0_i32_1 = arith.constant 0 : i32
    return %c0_i32, %c0_i32_0 : i32, i32
  }
  func.func @transform_3(%arg0: i32, %arg1: i32) -> (i32, i32) {
    %c0_i32 = arith.constant 0 : i32
    return %arg0, %arg1 : i32, i32
  }
  func.func @transform_4(%arg0: i32, %arg1: i32) -> (i32, i32) {
    %c0_i32 = arith.constant 0 : i32
    return %arg0, %arg1 : i32, i32
  }
  func.func @transform_5(%arg0: i32, %arg1: i32) -> (i32, i32) {
    %c0_i32 = arith.constant 0 : i32
    %c0_i32_0 = arith.constant 0 : i32
    %c0_i32_1 = arith.constant 0 : i32
    return %c0_i32, %c0_i32_0 : i32, i32
  }
  func.func @transform_6(%arg0: i32, %arg1: i32) -> (i32, i32) {
    %c0_i32 = arith.constant 0 : i32
    %c0_i32_0 = arith.constant 0 : i32
    %c0_i32_1 = arith.constant 0 : i32
    return %c0_i32, %c0_i32_0 : i32, i32
  }
  func.func @transform_7(%arg0: i32, %arg1: i32) -> (i32, i32) {
    %c0_i32 = arith.constant 0 : i32
    %c0_i32_0 = arith.constant 0 : i32
    return %arg0, %c0_i32 : i32, i32
  }
}

</mosaic_0001>

<llo_original>
// kernel: tpu_custom_call.1
$region0: #{tpu_custom_call.1}
  #allocation0 [shape = 'u32[]', space=smem, size = 0x4, offset = 0x4, fixed_abs, tag = 'smem constant byte address 0x4 - core index']
  #allocation1 [shape = 'u32[144,128]{1,0:T(1,128)}', space=vmem, size = 0x12000, scoped, tag = 'internal scratch']
  #allocation2 [shape = 'f32[8,1]{1,0:T(8,128)}', space=vmem, size = 0x1000, scoped, tag = 'scratch operand']
  #allocation3 [shape = 'f32[8,1]{1,0:T(8,128)}', space=vmem, size = 0x1000, scoped, tag = 'scratch operand']
  #allocation4 [shape = 'f32[8,1]{1,0:T(8,128)}', space=vmem, size = 0x1000, scoped, tag = 'scratch operand']
  #allocation5 [shape = 'f32[8,1]{1,0:T(8,128)}', space=vmem, size = 0x1000, scoped, tag = 'scratch operand']
  #allocation6 [shape = 'f32[1,1]{1,0:T(1,128)S(6)}', space=smem, size = 0x200, scoped, tag = 'scoped memory for tpu_custom_call.1']
  %s0 = inlined_call_operand.vmem [shape: f32[16,5], index: 0, kind: input, shape index: {}]
  %s1 = inlined_call_operand.vmem [shape: s32[16,1], index: 1, kind: input, shape index: {}]
  %s2 = inlined_call_operand.<no memory space> [shape: f32[1,1], index: 2, kind: input, shape index: {}]
  %s3 = inlined_call_operand.vmem [shape: bf16[8,128], index: 3, kind: input, shape index: {}]
  %s4 = inlined_call_operand.vmem [shape: bf16[8,128], index: 4, kind: input, shape index: {}]
  %s5 = inlined_call_operand.vmem [shape: f32[2,32], index: 5, kind: input, shape index: {}]
  %s6 = inlined_call_operand.vmem [shape: f32[2,32], index: 6, kind: input, shape index: {}]
  %s7 = inlined_call_operand.hbm [shape: f32[8,128], index: 7, kind: output, shape index: {}]
  %s8 = sld [smem:[#allocation0]]
  $region50: #{tpu_custom_call.1} parent=0
    _
  %s10 = ssub.s32 1, %s8
  %s11 = scalar_select 0, %s10, %s8
  %12 = sst [smem:[#allocation6]] %s2
  $region1: #{tpu_custom_call.1} parent=0
    #allocation7 [shape = 'u8[4096]{0}', space=vmem, size = 0x1000, scoped, tag = 'output window, operand 0, single buffered']
    #allocation8 [shape = 's32[1]{0}', space=sflag, size = 0x4, scoped, tag = 'scoped memory for tpu_custom_call.1']
    %13 = vsyncpa [#allocation8], 0
    // Predicated region
    $region2: #{tpu_custom_call.1} parent=1 // pred_check
      _
    $region3: #{tpu_custom_call.1} parent=1 // pred_check_branch
      %15 = sbr.rel (0) target = $region5
    $region4: #{tpu_custom_call.1} parent=1 // pred_region
      _
    $region5: #{tpu_custom_call.1} parent=1 // pred_fallthru
      _
    // Predicated region
    $region6: #{tpu_custom_call.1} parent=1 // pred_check
      _
    $region7: #{tpu_custom_call.1} parent=1 // pred_check_branch
      %17 = sbr.rel (0) target = $region9
    $region8: #{tpu_custom_call.1} parent=1 // pred_region
      _
    $region9: #{tpu_custom_call.1} parent=1 // pred_fallthru
      _
    // Predicated region
    $region10: #{tpu_custom_call.1} parent=1 // pred_check
      _
    $region11: #{tpu_custom_call.1} parent=1 // pred_check_branch
      %19 = sbr.rel (0) target = $region13
    $region12: #{tpu_custom_call.1} parent=1 // pred_region
      _
    $region13: #{tpu_custom_call.1} parent=1 // pred_fallthru
      _
    // Predicated region
    $region14: #{tpu_custom_call.1} parent=1 // pred_check
      _
    $region15: #{tpu_custom_call.1} parent=1 // pred_check_branch
      %21 = sbr.rel (0) target = $region17
    $region16: #{tpu_custom_call.1} parent=1 // pred_region
      _
    $region17: #{tpu_custom_call.1} parent=1 // pred_fallthru
      _
    // Predicated region
    $region18: #{tpu_custom_call.1} parent=1 // pred_check
      _
    $region19: #{tpu_custom_call.1} parent=1 // pred_check_branch
      %23 = sbr.rel (0) target = $region21
    $region20: #{tpu_custom_call.1} parent=1 // pred_region
      _
    $region21: #{tpu_custom_call.1} parent=1 // pred_fallthru
      _
    // Predicated region
    $region22: #{tpu_custom_call.1} parent=1 // pred_check
      _
    $region23: #{tpu_custom_call.1} parent=1 // pred_check_branch
      %25 = sbr.rel (0) target = $region25
    $region24: #{tpu_custom_call.1} parent=1 // pred_region
      _
    $region25: #{tpu_custom_call.1} parent=1 // pred_fallthru
      _
    // Predicated region
    $region26: #{tpu_custom_call.1} parent=1 // pred_check
      _
    $region27: #{tpu_custom_call.1} parent=1 // pred_check_branch
      %27 = sbr.rel (0) target = $region29
    $region28: #{tpu_custom_call.1} parent=1 // pred_region
      _
    $region29: #{tpu_custom_call.1} parent=1 // pred_fallthru
      _
    %p28 = scmp.eq.s32.totalorder 0, 0
    // Predicated region
    $region30: #{tpu_custom_call.1} parent=1 // pred_check
      %p29 = pneg %p28
    $region31: #{tpu_custom_call.1} parent=1 // pred_check_branch
      %31 = sbr.rel (%p29) target = $region33
    $region32: #{tpu_custom_call.1} parent=1 // pred_region
      %vm32 = vcmask 7168
      %33 = vst.msk [vmem:[#allocation2] sm:$0xff] %vm32, 0.0
      %34 = vst.msk [vmem:[#allocation3] sm:$0xff] %vm32, 0.0
      %35 = vst.msk [vmem:[#allocation4] sm:$0xff] %vm32, 0.0
      %36 = vst.msk [vmem:[#allocation5] sm:$0xff] %vm32, 0.0
    $region33: #{tpu_custom_call.1} parent=1 // pred_fallthru
      _
    %v37 = vld [vmem:[%s3] sm:$0xf]
    %v38 = vunpack.c.l.bf16 %v37
    %v39 = vld [vmem:[%s4] sm:$0xf]
    %v40 = vunpack.c.l.bf16 %v39
    %v41 = vand.u32 2147483647, %v38
    %v42 = vsub.f32 0.0, %v41
    %v43 = vmul.f32 %v42, 1.442695
    %v44 = vpow.pop %v43
    %v45 = vadd.f32 %v44, 1.0
    %v46 = vmax.f32 %v38, 0.0
    %v47 = vmul.f32 %v38, %v40
    %v48 = vsub.f32 %v46, %v47
    %v49 = vlog2.pop %v45
    %v50 = vmul.f32 %v49, 0.6931472
    %v51 = vadd.f32 %v48, %v50
    %v52 = vrcp.pop %v45
    %vm53 = vcmp.ge.f32.partialorder %v38, 0.0
    %v54 = vmul.f32 %v44, %v52
    %v55 = vsel %vm53, %v52, %v54
    %v56 = vld [vmem:[#allocation2] sm:$0xff]
    %57 = vadd.xlane.f32.xlu0 %v51
    %v58 = vpop.xlane.xlu0 %57
    %v59 = vadd.f32 %v56, %v58
    %vm60 = vcmask 7168
    %61 = vst.msk [vmem:[#allocation2] sm:$0xff] %vm60, %v59
    %v62 = vld [vmem:[#allocation3] sm:$0xff]
    %v63 = vmul.f32 %v55, %v40
    %64 = vadd.xlane.f32.xlu0 %v63
    %v65 = vpop.xlane.xlu0 %64
    %v66 = vadd.f32 %v62, %v65
    %67 = vst.msk [vmem:[#allocation3] sm:$0xff] %vm60, %v66
    %v68 = vld [vmem:[#allocation4] sm:$0xff]
    %69 = vadd.xlane.f32.xlu0 %v55
    %v70 = vpop.xlane.xlu0 %69
    %v71 = vadd.f32 %v68, %v70
    %72 = vst.msk [vmem:[#allocation4] sm:$0xff] %vm60, %v71
    %v73 = vld [vmem:[#allocation5] sm:$0xff]
    %74 = vadd.xlane.f32.xlu0 %v40
    %v75 = vpop.xlane.xlu0 %74
    %v76 = vadd.f32 %v73, %v75
    %77 = vst.msk [vmem:[#allocation5] sm:$0xff] %vm60, %v76
    // Predicated region
    $region34: #{tpu_custom_call.1} parent=1 // pred_check
      %p78 = pneg %p28
    $region35: #{tpu_custom_call.1} parent=1 // pred_check_branch
      %80 = sbr.rel (%p78) target = $region37
    $region36: #{tpu_custom_call.1} parent=1 // pred_region
      %v81 = vld [vmem:[#allocation2] sm:$0xff]
      %v82 = vsel %vm60, %v81, 0.0
      %83 = vadd.xlane.f32.xlu0 %v82
      %v84 = vpop.xlane.xlu0 %83
      %v85 = vrot.slane %v84, 4
      %v86 = vadd.f32 %v84, %v85
      %v87 = vrot.slane %v86, 2
      %v88 = vadd.f32 %v86, %v87
      %v89 = vrot.slane %v88, 1
      %v90 = vadd.f32 %v88, %v89
      %s91 = vtos %v90
      %s92 = smul.f32 %s91, 0.0125
      %v93 = vld [vmem:[#allocation3] sm:$0xff]
      %v94 = vmul.f32 %v93, 2.0
      %v95 = vadd.f32 %v94, 1.0
      %v96 = vld [vmem:[#allocation4] sm:$0xff]
      %v97 = vld [vmem:[#allocation5] sm:$0xff]
      %v98 = vadd.f32 %v96, %v97
      %v99 = vadd.f32 %v98, 1.0
      %v100 = vrcp.pop %v99
      %v101 = vmul.f32 %v95, %v100
      %v102 = vsub.f32 1.0, %v101
      %v103 = vsel %vm60, %v102, 0.0
      %104 = vadd.xlane.f32.xlu0 %v103
      %v105 = vpop.xlane.xlu0 %104
      %v106 = vrot.slane %v105, 4
      %v107 = vadd.f32 %v105, %v106
      %v108 = vrot.slane %v107, 2
      %v109 = vadd.f32 %v107, %v108
      %v110 = vrot.slane %v109, 1
      %v111 = vadd.f32 %v109, %v110
      %s112 = vtos %v111
      %s113 = smul.f32 %s112, 0.2
      %v114 = vlaneseq
      %v115 = vshrl.u32 %v114, 7
      %v116 = vlaneseq
      %v117 = vand.u32 %v116, 127
      %vm118 = vcmp.eq.s32.totalorder %v115, 0
      %vm119 = vcmp.eq.s32.totalorder %v117, 0
      %vm120 = vmand %vm118, %vm119
      %v121 = vstv %s92
      %v122 = vsel %vm120, %v121, 0.0
      %vm123 = vcmp.eq.s32.totalorder %v117, 1
      %vm124 = vmand %vm118, %vm123
      %v125 = vstv %s113
      %v126 = vsel %vm124, %v125, 0.0
      %v127 = vadd.f32 %v122, %v126
      %128 = vst [vmem:[#allocation7] sm:$0xff] %v127
    $region37: #{tpu_custom_call.1} parent=1 // pred_fallthru
      _
    %p129 = scmp.eq.s32.totalorder 0, 0
    %p130 = pnand %p129, %p28
    %p131 = pneg %p130
    // Predicated region
    $region38: #{tpu_custom_call.1} parent=1 // pred_check
      _
    $region39: #{tpu_custom_call.1} parent=1 // pred_check_branch
      %133 = sbr.rel (%p130) target = $region41
    $region40: #{tpu_custom_call.1} parent=1 // pred_region
      %v134 = vld [vmem:[%s0] sm:$0xff]
      %v135 = vld [vmem:[%s0 + $0x8] sm:$0xff]
      %v136 = vld [vmem:[%s1] sm:$0xff]
      %v137 = vld [vmem:[%s1 + $0x8] sm:$0xff]
      %vm138 = vcmask 39936
      %v139 = vsel %vm138, %v134, -inf
      %140 = vmax.xlane.f32.xlu0 %v139
      %v141 = vpop.xlane.xlu0 %140
      %v142 = vsel %vm138, %v135, -inf
      %143 = vmax.xlane.f32.xlu0 %v142
      %v144 = vpop.xlane.xlu0 %143
      %v145 = vsub.f32 %v134, %v141
      %v146 = vsub.f32 %v135, %v144
      %v147 = vmul.f32 %v145, 1.442695
      %v148 = vpow.pop %v147
      %v149 = vmul.f32 %v146, 1.442695
      %v150 = vpow.pop %v149
      %v151 = vsel %vm138, %v148, 0.0
      %152 = vadd.xlane.f32.xlu0 %v151
      %v153 = vpop.xlane.xlu0 %152
      %v154 = vsel %vm138, %v150, 0.0
      %155 = vadd.xlane.f32.xlu0 %v154
      %v156 = vpop.xlane.xlu0 %155
      %v157 = vlog2.pop %v153
      %v158 = vmul.f32 %v157, 0.6931472
      %v159 = vlog2.pop %v156
      %v160 = vmul.f32 %v159, 0.6931472
      %v161 = vadd.f32 %v158, %v141
      %v162 = vadd.f32 %v160, %v144
      %v163 = vlaneseq
      %v164 = vand.u32 %v163, 127
      %165 = vset.pattern.permute.xlu0 0
      %166 = vperm.xlu0 %165, %v136
      %v167 = vpop.permute.xlu0 %166
      %168 = vset.pattern.permute.xlu0 0
      %169 = vperm.xlu0 %168, %v137
      %v170 = vpop.permute.xlu0 %169
      %vm171 = vcmp.eq.s32.totalorder %v164, %v167
      %vm172 = vcmp.eq.s32.totalorder %v164, %v170
      %v173 = vsel %vm171, 1, 0
      %v174 = vsel %vm172, 1, 0
      %v175 = vcvt.s32.f32 %v173
      %v176 = vcvt.s32.f32 %v174
      %v177 = vmul.f32 %v134, %v175
      %v178 = vmul.f32 %v135, %v176
      %v179 = vsel %vm138, %v177, 0.0
      %180 = vadd.xlane.f32.xlu0 %v179
      %v181 = vpop.xlane.xlu0 %180
      %v182 = vsel %vm138, %v178, 0.0
      %183 = vadd.xlane.f32.xlu0 %v182
      %v184 = vpop.xlane.xlu0 %183
      %vm185 = vcmp.eq.s32.totalorder %v136, 4
      %vm186 = vcmp.eq.s32.totalorder %v137, 4
      %v187 = vsel %vm185, 0.1, 1.0
      %v188 = vsel %vm186, 0.1, 1.0
      %v189 = vsub.f32 %v161, %v181
      %v190 = vsub.f32 %v162, %v184
      %v191 = vmul.f32 %v187, %v189
      %v192 = vmul.f32 %v188, %v190
      %v193 = vsel %vm60, %v191, 0.0
      %v194 = vsel %vm60, %v192, 0.0
      %v195 = vadd.f32 %v193, %v194
      %196 = vadd.xlane.f32.xlu0 %v195
      %v197 = vpop.xlane.xlu0 %196
      %v198 = vrot.slane %v197, 4
      %v199 = vadd.f32 %v197, %v198
      %v200 = vrot.slane %v199, 2
      %v201 = vadd.f32 %v199, %v200
      %v202 = vrot.slane %v201, 1
      %v203 = vadd.f32 %v201, %v202
      %s204 = vtos %v203
      %v205 = vsel %vm60, %v187, 0.0
      %v206 = vsel %vm60, %v188, 0.0
      %v207 = vadd.f32 %v205, %v206
      %208 = vadd.xlane.f32.xlu0 %v207
      %v209 = vpop.xlane.xlu0 %208
      %v210 = vrot.slane %v209, 4
      %v211 = vadd.f32 %v209, %v210
      %v212 = vrot.slane %v211, 2
      %v213 = vadd.f32 %v211, %v212
      %v214 = vrot.slane %v213, 1
      %v215 = vadd.f32 %v213, %v214
      %s216 = vtos %v215
      %v217 = vstv %s216
      %v218 = vrcp.pop %v217
      %s219 = vtos %v218
      %s220 = smul.f32 %s204, %s219
      %v221 = vld [vmem:[%s5] sm:$0x3]
      %v222 = vld [vmem:[%s6] sm:$0x3]
      %v223 = vmul.f32 %v221, %v221
      %vm224 = vcmask 254976
      %v225 = vsel %vm224, %v223, 0.0
      %226 = vadd.xlane.f32.xlu0 %v225
      %v227 = vpop.xlane.xlu0 %226
      %v228 = vadd.f32 %v227, 1e-24
      %v229 = vrsqrt.pop %v228
      %v230 = vmul.f32 %v221, %v229
      %v231 = vmul.f32 %v222, %v222
      %v232 = vsel %vm224, %v231, 0.0
      %233 = vadd.xlane.f32.xlu0 %v232
      %v234 = vpop.xlane.xlu0 %233
      %v235 = vadd.f32 %v234, 1e-24
      %v236 = vrsqrt.pop %v235
      %v237 = vmul.f32 %v222, %v236
      %s238 = sld [smem:[#allocation6]]
      %vm239 = vcmask 261120
      %v241 = vsel %vm239, %v230, 0
      %v244 = vsel %vm239, %v237, 0
      %246 = vmatprep.subr.mxu0 0.0
      %247 = vmatpush1.xpose.msra.mxu0 0.0
      %248 = vmatprep.subr.mxu0 0.0
      %249 = vmatpush1.xpose.msra.mxu0 0.0
      %250 = vmatprep.subr.mxu0 0.0
      %251 = vmatpush1.xpose.msra.mxu0 0.0
      %252 = vmatprep.subr.mxu0 0.0
      %253 = vmatpush1.xpose.msra.mxu0 0.0
      %254 = vmatprep.subr.mxu0 0.0
      %255 = vmatpush1.xpose.msra.mxu0 0.0
      %256 = vmatprep.subr.mxu0 0.0
      %257 = vmatpush1.xpose.msra.mxu0 0.0
      %258 = vmatprep.subr.mxu0 0.0
      %259 = vmatpush1.xpose.msra.mxu0 0.0
      %260 = vmatprep.subr.mxu0 0.0
      %261 = vmatpush1.xpose.msra.mxu0 0.0
      %262 = vmatprep.subr.mxu0 0.0
      %263 = vmatpush1.xpose.msra.mxu0 0.0
      %264 = vmatprep.subr.mxu0 0.0
      %265 = vmatpush1.xpose.msra.mxu0 0.0
      %266 = vmatprep.subr.mxu0 0.0
      %267 = vmatpush1.xpose.msra.mxu0 0.0
      %268 = vmatprep.subr.mxu0 0.0
      %269 = vmatpush1.xpose.msra.mxu0 0.0
      %270 = vmatprep.subr.mxu0 0.0
      %271 = vmatpush1.xpose.msra.mxu0 0.0
      %272 = vmatprep.subr.mxu0 0.0
      %273 = vmatpush1.xpose.msra.mxu0 0.0
      %274 = vmatprep.subr.mxu0 0.0
      %275 = vmatpush1.xpose.msra.mxu0 0.0
      %276 = vmatprep.subr.mxu0 0.0
      %277 = vmatpush1.xpose.msra.mxu0 %v244
      %278 = vmatprep.subr.mxu0 0.0
      %279 = vmatpush2.xpose.msra.mxu0 0.0
      %280 = vmatprep.subr.mxu0 0.0
      %281 = vmatpush2.xpose.msra.mxu0 0.0
      %282 = vmatprep.subr.mxu0 0.0
      %283 = vmatpush2.xpose.msra.mxu0 0.0
      %284 = vmatprep.subr.mxu0 0.0
      %285 = vmatpush2.xpose.msra.mxu0 0.0
      %286 = vmatprep.subr.mxu0 0.0
      %287 = vmatpush2.xpose.msra.mxu0 0.0
      %288 = vmatprep.subr.mxu0 0.0
      %289 = vmatpush2.xpose.msra.mxu0 0.0
      %290 = vmatprep.subr.mxu0 0.0
      %291 = vmatpush2.xpose.msra.mxu0 0.0
      %292 = vmatprep.subr.mxu0 0.0
      %293 = vmatpush2.xpose.msra.mxu0 0.0
      %294 = vmatprep.subr.mxu0 0.0
      %295 = vmatpush2.xpose.msra.mxu0 0.0
      %296 = vmatprep.subr.mxu0 0.0
      %297 = vmatpush2.xpose.msra.mxu0 0.0
      %298 = vmatprep.subr.mxu0 0.0
      %299 = vmatpush2.xpose.msra.mxu0 0.0
      %300 = vmatprep.subr.mxu0 0.0
      %301 = vmatpush2.xpose.msra.mxu0 0.0
      %302 = vmatprep.subr.mxu0 0.0
      %303 = vmatpush2.xpose.msra.mxu0 0.0
      %304 = vmatprep.subr.mxu0 0.0
      %305 = vmatpush2.xpose.msra.mxu0 0.0
      %306 = vmatprep.subr.mxu0 0.0
      %307 = vmatpush2.xpose.msra.mxu0 0.0
      %308 = vmatprep.subr.mxu0 0.0
      %309 = vmatpush2.xpose.msra.mxu0 0.0
      %310 = vmatprep.mubr.f32.mxu0 0.0
      %311 = vmatmul.mubr.f32.gmra.mxu0 %v241
      %v312 = vpop.f32.mrf.mxu0
      %v313 = vadd.f32 0.0, %v312
      %v314 = vpop.f32.mrf.mxu0
      %315 = vdwg.mxu0
      %v316 = vstv %s238
      %v317 = vmul.f32 %v313, %v316
      %v318 = vmul.f32 %v230, %v237
      %v319 = vsel %vm224, %v318, 0.0
      %320 = vadd.xlane.f32.xlu0 %v319
      %v321 = vpop.xlane.xlu0 %320
      %v322 = vrot.slane %v321, 4
      %v323 = vadd.f32 %v321, %v322
      %v324 = vrot.slane %v323, 2
      %v325 = vadd.f32 %v323, %v324
      %v326 = vrot.slane %v325, 1
      %v327 = vadd.f32 %v325, %v326
      %s328 = vtos %v327
      %s329 = smul.f32 %s238, %s328
      %vm330 = vcmask 9216
      %v331 = vsel %vm330, %v317, -inf
      %332 = vmax.xlane.f32.xlu0 %v331
      %v333 = vpop.xlane.xlu0 %332
      %v334 = vsub.f32 %v317, %v333
      %v335 = vmul.f32 %v334, 1.442695
      %v336 = vpow.pop %v335
      %v337 = vsel %vm330, %v336, 0.0
      %338 = vadd.xlane.f32.xlu0 %v337
      %v339 = vpop.xlane.xlu0 %338
      %v340 = vlog2.pop %v339
      %v341 = vmul.f32 %v340, 0.6931472
      %v342 = vadd.f32 %v341, %v333
      %v343 = vrot.slane %v331, 4
      %v344 = vmax.f32 %v331, %v343
      %v345 = vrot.slane %v344, 2
      %v346 = vmax.f32 %v344, %v345
      %v347 = vrot.slane %v346, 1
      %v348 = vmax.f32 %v346, %v347
      %v349 = vsub.f32 %v317, %v348
      %v350 = vmul.f32 %v349, 1.442695
      %v351 = vpow.pop %v350
      %v352 = vsel %vm330, %v351, 0.0
      %v353 = vrot.slane %v352, 4
      %v354 = vadd.f32 %v352, %v353
      %v355 = vrot.slane %v354, 2
      %v356 = vadd.f32 %v354, %v355
      %v357 = vrot.slane %v356, 1
      %v358 = vadd.f32 %v356, %v357
      %v359 = vlog2.pop %v358
      %v360 = vmul.f32 %v359, 0.6931472
      %v361 = vadd.f32 %v360, %v348
      %vm362 = vcmask 1024
      %v363 = vsel %vm362, %v342, 0.0
      %364 = vadd.xlane.f32.xlu0 %v363
      %v365 = vpop.xlane.xlu0 %364
      %v366 = vrot.slane %v365, 4
      %v367 = vadd.f32 %v365, %v366
      %v368 = vrot.slane %v367, 2
      %v369 = vadd.f32 %v367, %v368
      %v370 = vrot.slane %v369, 1
      %v371 = vadd.f32 %v369, %v370
      %s372 = vtos %v371
      %vm373 = vcmask 8192
      %v374 = vsel %vm373, %v361, 0.0
      %375 = vadd.xlane.f32.xlu0 %v374
      %v376 = vpop.xlane.xlu0 %375
      %v377 = vrot.slane %v376, 4
      %v378 = vadd.f32 %v376, %v377
      %v379 = vrot.slane %v378, 2
      %v380 = vadd.f32 %v378, %v379
      %v381 = vrot.slane %v380, 1
      %v382 = vadd.f32 %v380, %v381
      %s383 = vtos %v382
      %s384 = sadd.f32 %s372, %s383
      %s385 = smul.f32 %s329, 2.0
      %s386 = ssub.f32 %s384, %s385
      %s387 = smul.f32 %s386, 0.5
      %v388 = vlaneseq
      %v389 = vshrl.u32 %v388, 7
      %vm390 = vcmp.eq.s32.totalorder %v389, 0
      %vm391 = vcmp.eq.s32.totalorder %v164, 2
      %vm392 = vmand %vm390, %vm391
      %v393 = vstv %s220
      %v394 = vsel %vm392, %v393, 0.0
      %vm395 = vcmp.eq.s32.totalorder %v164, 3
      %vm396 = vmand %vm390, %vm395
      %v397 = vstv %s387
      %v398 = vsel %vm396, %v397, 0.0
      %v399 = vadd.f32 %v394, %v398
      %v400 = vld [vmem:[#allocation7] sm:$0xff]
      %v401 = vadd.f32 %v400, %v399
      %402 = vst [vmem:[#allocation7] sm:$0xff] %v401
    $region41: #{tpu_custom_call.1} parent=1 // pred_fallthru
      _
    // Predicated region
    $region42: #{tpu_custom_call.1} parent=1 // pred_check
      _
    $region43: #{tpu_custom_call.1} parent=1 // pred_check_branch
      %404 = sbr.rel (0) target = $region45
    $region44: #{tpu_custom_call.1} parent=1 // pred_region
      %s406 = ssub.s32 128, 128
      %407 = vsyncadd [#allocation8], %s406
      %s409 = sshll.u32 [#allocation7], 4
      %s410 = int_to_ptr.vmem [resolvable:$true] %s409
      %412 = dma.vmem_to_hbm [thread:$0]  %s410, 128, %s7, [#allocation8]
    $region45: #{tpu_custom_call.1} parent=1 // pred_fallthru
      _
    // Predicated region
    $region46: #{tpu_custom_call.1} parent=1 // pred_check
      _
    $region47: #{tpu_custom_call.1} parent=1 // pred_check_branch
      %414 = sbr.rel (0) target = $region49
    $region48: #{tpu_custom_call.1} parent=1 // pred_region
      %415 = dma.done [#allocation8], 128
    $region49: #{tpu_custom_call.1} parent=1 // pred_fallthru
      _
    %416 = vsyncpa [#allocation8], 1

</llo_original>
